<compile_context>
chip_gen: v7x
topology: tpu7x:2x2x1
jax: 0.10.0
libtpu: 0.0.40
codegen_flags: <defaults>
</compile_context>

<pallas_src>
import functools

import jax
import jax.numpy as jnp
from jax import lax
from jax.experimental import pallas as pl
from jax.experimental.pallas import tpu as pltpu

_LANE = 128


def _round_up(v, m):
    return ((v + m - 1) // m) * m


def _cam_kernel(gamma_ref, x_ref, o_ref, att_acc_ref, att_g_ref, *cache_refs,
                mxu_dtype, use_cache):
    """Grid = (batch, phase, hw_tile)."""
    if use_cache:
        (x_cache_ref,) = cache_refs

    phase = pl.program_id(1)
    k = pl.program_id(2)
    last_k = pl.num_programs(2) - 1

    @pl.when(phase == 0)
    def _energy_phase():
        xt = x_ref[0].astype(mxu_dtype)                       # (C, hw_tile)
        if use_cache:
            # Persist the cast tile so phase 1 never re-reads x from HBM.
            x_cache_ref[k] = xt

        # Partial energy: contract the HW axis of both operands -> (C, C).
        # NT form == pl.dot(xt, xt, trans_b=True); uses the MXU transposed-RHS
        # path, fp32 accumulation.
        partial = lax.dot_general(
            xt, xt, (((1,), (1,)), ((), ())),
            preferred_element_type=jnp.float32)

        @pl.when(k == 0)
        def _():
            att_acc_ref[...] = partial

        @pl.when(k > 0)
        def _():
            att_acc_ref[...] += partial

        @pl.when(k == last_k)
        def _softmax():
            energy = att_acc_ref[...]                         # (C, C) fp32
            # softmax(rowmax(E) - E) is shift-invariant; its stabilized form
            # is exp(rowmin(E) - E) / sum(...): a single row reduction.
            row_min = jnp.min(energy, axis=-1, keepdims=True)
            e = jnp.exp(row_min - energy)
            denom = jnp.sum(e, axis=-1, keepdims=True)
            att = e * pl.reciprocal(denom, approx=False)      # exact 1/denom
            # Fold gamma and cast to the MXU dtype exactly once per batch:
            #   gamma * (att @ x) + x == (gamma * att) @ x + x
            att_g_ref[...] = (gamma_ref[0] * att).astype(att_g_ref.dtype)

    @pl.when(phase == 1)
    def _apply_phase():
        if use_cache:
            xt = x_cache_ref[k]                               # (C, hw_tile)
        else:
            xt = x_ref[0].astype(mxu_dtype)
        out = jnp.dot(att_g_ref[...], xt,
                      preferred_element_type=jnp.float32)     # (C, hw_tile)
        o_ref[0] = (out + xt.astype(jnp.float32)).astype(o_ref.dtype)


def cam_module(x, gamma, *, hw_tile=None, mxu_dtype=jnp.bfloat16,
               vmem_budget_bytes=None, batch_core_parallel=False):
    """CAM channel attention.  x: (B, C, H, W); gamma: shape-(1,) scalar."""
    B, C, H, W = x.shape
    HW = H * W
    hw_aligned = _round_up(HW, _LANE)

    in_itemsize = jnp.dtype(x.dtype).itemsize
    mxu_itemsize = jnp.dtype(mxu_dtype).itemsize

    # Per-generation VMEM budget (v7x: 64 MiB physical; v5e/v6e: 128 MiB).
    try:
        phys_vmem = int(pltpu.get_tpu_info().vmem_capacity_bytes)
    except Exception:
        phys_vmem = 64 * 1024 * 1024                  # conservative (v7x)
    if vmem_budget_bytes is None:
        vmem_budget_bytes = min(phys_vmem * 3 // 4, 80 * 1024 * 1024)

    def vmem_need(tile, with_cache):
        nk = -(-hw_aligned // tile)
        hwp = nk * tile
        need = 4 * C * tile * in_itemsize             # x + out double buffers
        need += C * C * (4 + mxu_itemsize)            # energy acc + folded att
        if with_cache:
            need += C * hwp * mxu_itemsize            # persistent x tile cache
        return need + (2 << 20)                       # headroom

    if hw_tile is None:
        # Largest lane-aligned tile (<= 2048) whose streaming footprint fits;
        # amortizes the ~0.35 us fixed per-grid-step pipeline overhead.
        tile = _round_up(min(2048, hw_aligned), _LANE)
        while tile > _LANE and vmem_need(tile, False) > vmem_budget_bytes:
            tile -= _LANE
        hw_tile = max(_LANE, tile)
    else:
        hw_tile = _round_up(max(_LANE, min(hw_tile, hw_aligned)), _LANE)

    hw_pad = _round_up(hw_aligned, hw_tile)
    num_k = hw_pad // hw_tile
    # Enable the VMEM x-cache iff it fits the budget: removes the second HBM
    # pass over x (up to ~1/3 of total HBM traffic) and the per-tile recast.
    use_cache = vmem_need(hw_tile, True) <= vmem_budget_bytes

    x_flat = x.reshape(B, C, HW)
    if hw_pad != HW:
        # Zero padding contributes nothing to energy / out; sliced off below.
        x_flat = jnp.pad(x_flat, ((0, 0), (0, 0), (0, hw_pad - HW)))

    gamma = jnp.asarray(gamma, jnp.float32).reshape(1)

    hbm_passes = 2 if use_cache else 3                # read x (1x or 2x) + write
    cost = pl.CostEstimate(
        flops=int(4 * B * C * C * hw_pad),            # two (C,C,HW) matmuls
        transcendentals=int(B * C * C),               # softmax exp
        bytes_accessed=int(hbm_passes * B * C * hw_pad * in_itemsize),
    )

    vmem_limit = int(min(phys_vmem,
                         max(32 * 1024 * 1024,
                             vmem_need(hw_tile, use_cache) + (4 << 20))))

    if use_cache:
        # Phase 1 reads only the VMEM cache; park the x block index at 0
        # (k*(1-p)) so only one redundant tile DMA occurs per phase switch.
        x_index = lambda b, p, k: (b, 0, k * (1 - p))
    else:
        x_index = lambda b, p, k: (b, 0, k)

    scratch = [pltpu.VMEM((C, C), jnp.float32),       # fp32 energy accumulator
               pltpu.VMEM((C, C), mxu_dtype)]         # gamma-folded attention
    if use_cache:
        scratch.append(pltpu.VMEM((num_k, C, hw_tile), mxu_dtype))

    if batch_core_parallel:
        # v7x: split the batch axis across the two TensorCores.
        dims = (pltpu.CORE_PARALLEL, pltpu.ARBITRARY, pltpu.ARBITRARY)
    else:
        dims = ("parallel", "arbitrary", "arbitrary")
    # NOTE: pipeline_mode=pl.Buffered(3) on the x BlockSpec is worth sweeping
    # on v6e (hides DMA jitter around the softmax bubble); left at default 2.

    kernel = functools.partial(_cam_kernel, mxu_dtype=mxu_dtype,
                               use_cache=use_cache)

    out_flat = pl.pallas_call(
        kernel,
        out_shape=jax.ShapeDtypeStruct((B, C, hw_pad), x.dtype),
        grid_spec=pltpu.PrefetchScalarGridSpec(
            num_scalar_prefetch=0,
            grid=(B, 2, num_k),                       # (batch, phase, hw tile)
            in_specs=[
                pl.BlockSpec(memory_space=pltpu.MemorySpace.SMEM),   # gamma
                pl.BlockSpec((1, C, hw_tile), x_index),              # x
            ],
            # Phase 0 never writes the output: park the block index at
            # (b, 0, 0) (k*p == 0) so no garbage tiles are flushed to HBM.
            out_specs=pl.BlockSpec((1, C, hw_tile),
                                   lambda b, p, k: (b, 0, k * p)),
            scratch_shapes=scratch,
        ),
        compiler_params=pltpu.CompilerParams(
            dimension_semantics=dims,
            vmem_limit_bytes=vmem_limit,
        ),
        cost_estimate=cost,
    )(gamma, x_flat)

    if hw_pad != HW:
        out_flat = out_flat[:, :, :HW]
    return out_flat.reshape(B, C, H, W)


def cam_reference(x, gamma):
    """Exact PyTorch CAM_Module semantics (true fp32 matmuls)."""
    B, C, H, W = x.shape
    xf = x.reshape(B, C, H * W).astype(jnp.float32)
    energy = jnp.einsum('bcn,bdn->bcd', xf, xf, precision='highest')
    energy_new = jnp.max(energy, axis=-1, keepdims=True) - energy
    attention = jax.nn.softmax(energy_new, axis=-1)
    out = jnp.einsum('bcd,bdn->bcn', attention, xf,
                     precision='highest').reshape(B, C, H, W)
    return gamma[0] * out + x


def cam_reference_bf16(x, gamma):
    """Precision-matched to the kernel's default bf16 MXU-operand path."""
    B, C, H, W = x.shape
    xm = x.reshape(B, C, H * W).astype(jnp.bfloat16)
    energy = jnp.einsum('bcn,bdn->bcd', xm, xm,
                        preferred_element_type=jnp.float32)
    energy_new = jnp.max(energy, axis=-1, keepdims=True) - energy
    attention = jax.nn.softmax(energy_new, axis=-1)
    att_g = (gamma[0] * attention).astype(jnp.bfloat16)
    out = jnp.einsum('bcd,bdn->bcn', att_g, xm,
                     preferred_element_type=jnp.float32)
    res = out + xm.astype(jnp.float32)
    return res.reshape(B, C, H, W).astype(x.dtype)


if __name__ == "__main__":
    key = jax.random.PRNGKey(0)
    B, C, H, W = 2, 4, 16, 16
    x = jax.random.normal(key, (B, C, H, W), dtype=jnp.float32)

    # PyTorch initializes gamma = 0; use a nonzero value so the attention path
    # is actually exercised.
    gamma = jnp.array([0.5], dtype=jnp.float32)

    # 1) fp32 MXU path, forced multi-tile (HW=256, hw_tile=128 -> 2 tiles):
    #    exact module semantics, exercises energy accumulation + x cache.
    out_f32 = jax.block_until_ready(
        cam_module(x, gamma, hw_tile=128, mxu_dtype=jnp.float32))
    ref_f32 = cam_reference(x, gamma)
    assert out_f32.shape == (B, C, H, W)
    assert jnp.allclose(out_f32, ref_f32, atol=5e-4, rtol=5e-4), \
        "fp32 path mismatch vs exact reference"

    # 2) Default bf16 MXU-operand path with VMEM-budget-derived tiling,
    #    verified against a precision-matched reference.
    out_bf16 = jax.block_until_ready(cam_module(x, gamma))
    ref_bf16 = cam_reference_bf16(x, gamma)
    assert out_bf16.shape == (B, C, H, W)
    assert jnp.allclose(out_bf16, ref_bf16, atol=1e-2, rtol=1e-2), \
        "bf16 path (default tiling) mismatch vs precision-matched reference"

    # 3) bf16 path, forced multi-tile (exercises cached-tile phase 1).
    out_bf16_t = jax.block_until_ready(cam_module(x, gamma, hw_tile=128))
    assert jnp.allclose(out_bf16_t, ref_bf16, atol=1e-2, rtol=1e-2), \
        "bf16 path (multi-tile) mismatch vs precision-matched reference"

    print("KERNEL_OK")
</pallas_src>

<mosaic_0001>
module attributes {stable_mosaic.version = 11 : i64} {
  func.func @_cam_kernel(%arg0: i32, %arg1: i32, %arg2: i32, %arg3: memref<1xf32, #tpu.memory_space<smem>>, %arg4: memref<1x4x128xf32, #tpu.memory_space<vmem>>, %arg5: memref<1x4x128xf32, #tpu.memory_space<vmem>>, %arg6: memref<4x4xf32, #tpu.memory_space<vmem>>, %arg7: memref<4x4xf32, #tpu.memory_space<vmem>>, %arg8: memref<2x4x128xf32, #tpu.memory_space<vmem>>) attributes {dimension_semantics = [#tpu.dimension_semantics<parallel>, #tpu.dimension_semantics<arbitrary>, #tpu.dimension_semantics<arbitrary>], iteration_bounds = array<i64: 2, 2, 2>, scalar_prefetch = 0 : i64, scratch_operands = 3 : i64, tpu.core_type = #tpu.core_type<tc>, window_params = [{transform_indices = @transform_0, window_bounds = array<i64: 1>}, {transform_indices = @transform_1, window_bounds = array<i64: 1, 4, 128>}, {transform_indices = @transform_2, window_bounds = array<i64: 1, 4, 128>}]} {
    %c0_i32 = arith.constant 0 : i32
    %0 = arith.cmpi eq, %arg1, %c0_i32 : i32
    %1 = arith.extui %0 : i1 to i32
    %c0_i32_0 = arith.constant 0 : i32
    %2 = arith.cmpi ne, %1, %c0_i32_0 : i32
    scf.if %2 {
      %c0 = arith.constant 0 : index
      %c0_2 = arith.constant 0 : index
      %c0_3 = arith.constant 0 : index
      %6 = vector.load %arg4[%c0, %c0_2, %c0_3] : memref<1x4x128xf32, #tpu.memory_space<vmem>>, vector<1x4x128xf32>
      %7 = vector.shape_cast %6 : vector<1x4x128xf32> to vector<4x128xf32>
      %8 = arith.index_cast %arg2 : i32 to index
      %c0_4 = arith.constant 0 : index
      %c0_5 = arith.constant 0 : index
      %9 = vector.load %arg8[%8, %c0_4, %c0_5] : memref<2x4x128xf32, #tpu.memory_space<vmem>>, vector<1x4x128xf32>
      %10 = vector.shape_cast %9 : vector<1x4x128xf32> to vector<4x128xf32>
      %11 = vector.shape_cast %7 : vector<4x128xf32> to vector<1x4x128xf32>
      tpu.vector_store %arg8[%8, %c0_4, %c0_5], %11 {strides = array<i32>} : memref<2x4x128xf32, #tpu.memory_space<vmem>>, vector<1x4x128xf32>,
      %cst = arith.constant dense<0.000000e+00> : vector<4x4xf32>
      %12 = tpu.matmul %7, %7, %cst {dimension_numbers = #tpu.dot_dimension_numbers<[1], [1], [0], [0], [0, 0, 1, 0], [], []>} : vector<4x128xf32>, vector<4x128xf32>, vector<4x4xf32> -> vector<4x4xf32>
      %c0_i32_6 = arith.constant 0 : i32
      %13 = arith.cmpi eq, %arg2, %c0_i32_6 : i32
      %14 = arith.extui %13 : i1 to i32
      %c0_i32_7 = arith.constant 0 : i32
      %15 = arith.cmpi ne, %14, %c0_i32_7 : i32
      scf.if %15 {
        %c0_12 = arith.constant 0 : index
        %c0_13 = arith.constant 0 : index
        %22 = vector.load %arg6[%c0_12, %c0_13] : memref<4x4xf32, #tpu.memory_space<vmem>>, vector<4x4xf32>
        tpu.vector_store %arg6[%c0_12, %c0_13], %12 {strides = array<i32>} : memref<4x4xf32, #tpu.memory_space<vmem>>, vector<4x4xf32>,
      } else {
      }
      %c0_i32_8 = arith.constant 0 : i32
      %16 = arith.cmpi sgt, %arg2, %c0_i32_8 : i32
      %17 = arith.extui %16 : i1 to i32
      %c0_i32_9 = arith.constant 0 : i32
      %18 = arith.cmpi ne, %17, %c0_i32_9 : i32
      scf.if %18 {
        %c0_12 = arith.constant 0 : index
        %c0_13 = arith.constant 0 : index
        %22 = vector.load %arg6[%c0_12, %c0_13] : memref<4x4xf32, #tpu.memory_space<vmem>>, vector<4x4xf32>
        %23 = arith.addf %22, %12 : vector<4x4xf32>
        %c0_14 = arith.constant 0 : index
        %c0_15 = arith.constant 0 : index
        %24 = vector.load %arg6[%c0_14, %c0_15] : memref<4x4xf32, #tpu.memory_space<vmem>>, vector<4x4xf32>
        tpu.vector_store %arg6[%c0_14, %c0_15], %23 {strides = array<i32>} : memref<4x4xf32, #tpu.memory_space<vmem>>, vector<4x4xf32>,
      } else {
      }
      %c1_i32_10 = arith.constant 1 : i32
      %19 = arith.cmpi eq, %arg2, %c1_i32_10 : i32
      %20 = arith.extui %19 : i1 to i32
      %c0_i32_11 = arith.constant 0 : i32
      %21 = arith.cmpi ne, %20, %c0_i32_11 : i32
      scf.if %21 {
        %c0_12 = arith.constant 0 : index
        %c0_13 = arith.constant 0 : index
        %22 = vector.load %arg6[%c0_12, %c0_13] : memref<4x4xf32, #tpu.memory_space<vmem>>, vector<4x4xf32>
        %cst_14 = arith.constant dense<0x7F800000> : vector<4xf32>
        %23 = vector.multi_reduction <minimumf>, %22, %cst_14 [1] : vector<4x4xf32> to vector<4xf32>
        %24 = vector.shape_cast %23 : vector<4xf32> to vector<4x1xf32>
        %25 = vector.broadcast %24 : vector<4x1xf32> to vector<4x4xf32>
        %26 = arith.subf %25, %22 : vector<4x4xf32>
        %27 = math.exp %26 : vector<4x4xf32>
        %cst_15 = arith.constant dense<0.000000e+00> : vector<4xf32>
        %28 = vector.multi_reduction <add>, %27, %cst_15 [1] : vector<4x4xf32> to vector<4xf32>
        %29 = vector.shape_cast %28 : vector<4xf32> to vector<4x1xf32>
        %30 = tpu.reciprocal %29 : vector<4x1xf32> -> vector<4x1xf32>
        %31 = vector.broadcast %30 : vector<4x1xf32> to vector<4x4xf32>
        %32 = arith.mulf %27, %31 : vector<4x4xf32>
        %c0_16 = arith.constant 0 : index
        %33 = memref.load %arg3[%c0_16] : memref<1xf32, #tpu.memory_space<smem>>
        %34 = vector.broadcast %33 : f32 to vector<4x4xf32>
        %35 = arith.mulf %34, %32 : vector<4x4xf32>
        %c0_17 = arith.constant 0 : index
        %c0_18 = arith.constant 0 : index
        %36 = vector.load %arg7[%c0_17, %c0_18] : memref<4x4xf32, #tpu.memory_space<vmem>>, vector<4x4xf32>
        tpu.vector_store %arg7[%c0_17, %c0_18], %35 {strides = array<i32>} : memref<4x4xf32, #tpu.memory_space<vmem>>, vector<4x4xf32>,
      } else {
      }
    } else {
    }
    %c1_i32 = arith.constant 1 : i32
    %3 = arith.cmpi eq, %arg1, %c1_i32 : i32
    %4 = arith.extui %3 : i1 to i32
    %c0_i32_1 = arith.constant 0 : i32
    %5 = arith.cmpi ne, %4, %c0_i32_1 : i32
    scf.if %5 {
      %6 = arith.index_cast %arg2 : i32 to index
      %c0 = arith.constant 0 : index
      %c0_2 = arith.constant 0 : index
      %7 = vector.load %arg8[%6, %c0, %c0_2] : memref<2x4x128xf32, #tpu.memory_space<vmem>>, vector<1x4x128xf32>
      %8 = vector.shape_cast %7 : vector<1x4x128xf32> to vector<4x128xf32>
      %c0_3 = arith.constant 0 : index
      %c0_4 = arith.constant 0 : index
      %9 = vector.load %arg7[%c0_3, %c0_4] : memref<4x4xf32, #tpu.memory_space<vmem>>, vector<4x4xf32>
      %cst = arith.constant dense<0.000000e+00> : vector<4x128xf32>
      %10 = tpu.matmul %9, %8, %cst {dimension_numbers = #tpu.dot_dimension_numbers<[1], [0], [0], [1], [0, 0, 1, 1], [], []>} : vector<4x4xf32>, vector<4x128xf32>, vector<4x128xf32> -> vector<4x128xf32>
      %11 = arith.addf %10, %8 : vector<4x128xf32>
      %c0_5 = arith.constant 0 : index
      %c0_6 = arith.constant 0 : index
      %c0_7 = arith.constant 0 : index
      %12 = vector.load %arg5[%c0_5, %c0_6, %c0_7] : memref<1x4x128xf32, #tpu.memory_space<vmem>>, vector<1x4x128xf32>
      %13 = vector.shape_cast %12 : vector<1x4x128xf32> to vector<4x128xf32>
      %14 = vector.shape_cast %11 : vector<4x128xf32> to vector<1x4x128xf32>
      tpu.vector_store %arg5[%c0_5, %c0_6, %c0_7], %14 {strides = array<i32>} : memref<1x4x128xf32, #tpu.memory_space<vmem>>, vector<1x4x128xf32>,
    } else {
    }
    return
  }
  func.func @transform_0(%arg0: i32, %arg1: i32, %arg2: i32) -> i32 {
    %c0_i32 = arith.constant 0 : i32
    %c0_i32_0 = arith.constant 0 : i32
    return %c0_i32 : i32
  }
  func.func @transform_1(%arg0: i32, %arg1: i32, %arg2: i32) -> (i32, i32, i32) {
    %c1_i32 = arith.constant 1 : i32
    %0 = arith.subi %c1_i32, %arg1 : i32
    %1 = arith.muli %arg2, %0 : i32
    %c0_i32 = arith.constant 0 : i32
    %c0_i32_0 = arith.constant 0 : i32
    return %arg0, %c0_i32, %1 : i32, i32, i32
  }
  func.func @transform_2(%arg0: i32, %arg1: i32, %arg2: i32) -> (i32, i32, i32) {
    %0 = arith.muli %arg2, %arg1 : i32
    %c0_i32 = arith.constant 0 : i32
    %c0_i32_0 = arith.constant 0 : i32
    return %arg0, %c0_i32, %0 : i32, i32, i32
  }
}

</mosaic_0001>

<llo_original>
// kernel: tpu_custom_call.1
$region0: #{tpu_custom_call.1}
  #allocation0 [shape = 'u32[]', space=smem, size = 0x4, offset = 0x4, fixed_abs, tag = 'smem constant byte address 0x4 - core index']
  #allocation1 [shape = 'u32[144,128]{1,0:T(1,128)}', space=vmem, size = 0x12000, scoped, tag = 'internal scratch']
  #allocation2 [shape = 'f32[4,4]{1,0:T(4,128)}', space=vmem, size = 0x800, scoped, tag = 'scratch operand']
  #allocation3 [shape = 'f32[4,4]{1,0:T(4,128)}', space=vmem, size = 0x800, scoped, tag = 'scratch operand']
  #allocation4 [shape = 'f32[2,4,128]{2,1,0:T(4,128)}', space=vmem, size = 0x1000, scoped, tag = 'scratch operand']
  #allocation5 [shape = 'f32[1]{0:T(128)S(6)}', space=smem, size = 0x200, scoped, tag = 'scoped memory for tpu_custom_call.1']
  %s0 = inlined_call_operand.<no memory space> [shape: f32[1], index: 0, kind: input, shape index: {}]
  %s1 = inlined_call_operand.hbm [shape: f32[2,4,256], index: 1, kind: input, shape index: {}]
  %s2 = inlined_call_operand.hbm [shape: f32[2,4,256], index: 2, kind: output, shape index: {}]
  %s3 = sld [smem:[#allocation0]]
  $region65: #{tpu_custom_call.1} parent=0
    _
  %s5 = ssub.s32 1, %s3
  %s6 = scalar_select 0, %s5, %s3
  %7 = sst [smem:[#allocation5]] %s0
  $region1: #{tpu_custom_call.1} parent=0
    #allocation6 [shape = 'u8[4096]{0}', space=vmem, size = 0x1000, scoped, tag = 'input window, operand 1']
    #allocation7 [shape = 's32[2]{0}', space=sflag, size = 0x8, scoped, tag = 'scoped memory for tpu_custom_call.1']
    #allocation8 [shape = 's32[2]{0}', space=sflag, size = 0x8, scoped, tag = 'scoped memory for tpu_custom_call.1']
    #allocation9 [shape = 'u8[4096]{0}', space=vmem, size = 0x1000, scoped, tag = 'output window, operand 0']
    %8 = vsyncpa [#allocation7], 0
    %s9 = scalar_lea.sflag [#allocation7], 1
    %10 = vsyncpa %s9, 0
    %11 = vsyncpa [#allocation8], 0
    %s12 = scalar_lea.sflag [#allocation8], 1
    %13 = vsyncpa %s12, 0
    loop: start=0, step=1, limit=10
    $region2: #{tpu_custom_call.1} parent=1 // loop_pre_header
      _
    $region3: #{tpu_custom_call.1} parent=1 // loop_header
      %s15 = sphi 0, %s19
      %p16 = scmp.ge.s32.totalorder %s15, 10
      %s22 = sphi 0, %s41
      %s23 = sphi 0, %s37
      %s24 = sphi 0, %s33
      %s25 = sphi 0, %s22
      %s26 = sphi 0, %s23
      %s27 = sphi 0, %s24
      %s28 = sphi 0, %s25
      %s29 = sphi 0, %s26
      %s30 = sphi 0, %s27
      %s42 = sphi 0, %s42
      %s44 = sphi 0, %s42
      %s45 = sphi 0, %s44
      %s59 = sphi 0, %s45
      %s71 = sphi 0, %s73
      %s74 = sphi 0, %s71
      %s75 = sphi 0, %s74
      %s91 = sphi 0, %s75
      %s101 = sphi 0, %s103
      %s104 = sphi 0, %s101
      %s105 = sphi 0, %s104
      %s121 = sphi 0, %s105
    $region4: #{tpu_custom_call.1} parent=1 // loop_header_branch
      %18 = sbr.rel (%p16) target = $region8
    $region5: #{tpu_custom_call.1} parent=1 // loop_body
      %s20 = ssub.s32 %s15, 1
      %s21 = ssub.s32 %s15, 2
      %s31 = sadd.s32 1, %s24
      %p32 = scmp.ge.s32.totalorder %s31, 2
      %s33 = scalar_select %p32, 0, %s31
      %s34 = sadd.s32 1, %s23
      %s35 = scalar_select %p32, %s34, %s23
      %p36 = scmp.ge.s32.totalorder %s35, 2
      %s37 = scalar_select %p36, 0, %s35
      %s38 = sadd.s32 1, %s22
      %s39 = scalar_select %p36, %s38, %s22
      %p40 = scmp.ge.s32.totalorder %s39, 2
      %s41 = scalar_select %p40, 0, %s39
      %s43 = sadd.s32 %s42, 1
      %p46 = scmp.eq.s32.totalorder %s15, 7
      %p47 = scmp.ne.s32.totalorder %s42, %s44
      %p48 = scmp.eq.s32.totalorder %s15, 0
      %p49 = por %p47, %p48
      %p50 = scmp.ne.s32.totalorder %s42, %s44
      %p51 = scmp.eq.s32.totalorder %s20, 7
      %p52 = por %p50, %p51
      %p53 = scmp.ne.s32.totalorder %s44, %s45
      %p54 = scmp.eq.s32.totalorder %s20, 0
      %p55 = por %p53, %p54
      %p56 = scmp.ne.s32.totalorder %s44, %s45
      %p57 = scmp.eq.s32.totalorder %s21, 7
      %p58 = por %p56, %p57
      %p60 = scmp.ne.s32.totalorder %s45, %s59
      %p61 = scmp.eq.s32.totalorder %s21, 0
      %p62 = por %p60, %p61
      %s63 = ssub.s32 1, %s23
      %s64 = smul.u32 %s24, %s63
      %s65 = ssub.s32 1, %s37
      %s66 = smul.u32 %s33, %s65
      %s67 = ssub.s32 %s22, %s41
      %s68 = ssub.s32 %s64, %s66
      %s69 = sor.u32 %s67, %s68
      %p70 = scmp.eq.s32.totalorder %s69, 0
      %s72 = sadd.s32 %s71, 1
      %s73 = scalar_select %p70, %s71, %s72
      %p76 = pneg %p70
      %p77 = scmp.eq.s32.totalorder %s15, 7
      %p78 = por %p76, %p77
      %p79 = scmp.ne.s32.totalorder %s71, %s74
      %p80 = scmp.eq.s32.totalorder %s15, 0
      %p81 = por %p79, %p80
      %p82 = scmp.ne.s32.totalorder %s71, %s74
      %p83 = scmp.eq.s32.totalorder %s20, 7
      %p84 = por %p82, %p83
      %p85 = scmp.ne.s32.totalorder %s74, %s75
      %p86 = scmp.eq.s32.totalorder %s20, 0
      %p87 = por %p85, %p86
      %p88 = scmp.ne.s32.totalorder %s74, %s75
      %p89 = scmp.eq.s32.totalorder %s21, 7
      %p90 = por %p88, %p89
      %p92 = scmp.ne.s32.totalorder %s75, %s91
      %p93 = scmp.eq.s32.totalorder %s21, 0
      %p94 = por %p92, %p93
      %s95 = smul.u32 %s24, %s23
      %s96 = smul.u32 %s33, %s37
      %s97 = ssub.s32 %s22, %s41
      %s98 = ssub.s32 %s95, %s96
      %s99 = sor.u32 %s97, %s98
      %p100 = scmp.eq.s32.totalorder %s99, 0
      %s102 = sadd.s32 %s101, 1
      %s103 = scalar_select %p100, %s101, %s102
      %p106 = pneg %p100
      %p107 = scmp.eq.s32.totalorder %s15, 7
      %p108 = por %p106, %p107
      %p109 = scmp.ne.s32.totalorder %s101, %s104
      %p110 = scmp.eq.s32.totalorder %s15, 0
      %p111 = por %p109, %p110
      %p112 = scmp.ne.s32.totalorder %s101, %s104
      %p113 = scmp.eq.s32.totalorder %s20, 7
      %p114 = por %p112, %p113
      %p115 = scmp.ne.s32.totalorder %s104, %s105
      %p116 = scmp.eq.s32.totalorder %s20, 0
      %p117 = por %p115, %p116
      %p118 = scmp.ne.s32.totalorder %s104, %s105
      %p119 = scmp.eq.s32.totalorder %s21, 7
      %p120 = por %p118, %p119
      %p122 = scmp.ne.s32.totalorder %s105, %s121
      %p123 = scmp.eq.s32.totalorder %s21, 0
      %p124 = por %p122, %p123
      %p125 = scmp.le.s32.totalorder 1, %s15
      %p126 = scmp.lt.s32.totalorder %s15, 9
      %p127 = pnand %p125, %p126
      %p128 = pneg %p127
      // Predicated region
      $region9: #{tpu_custom_call.1} parent=5 // pred_check
        _
      $region10: #{tpu_custom_call.1} parent=5 // pred_check_branch
        %130 = sbr.rel (%p127) target = $region12
      $region11: #{tpu_custom_call.1} parent=5 // pred_region
        %s131 = ssub.s32 %s15, 1
        // Predicated region
        $region13: #{tpu_custom_call.1} parent=11 // pred_check
          %p132 = pneg %p55
        $region14: #{tpu_custom_call.1} parent=11 // pred_check_branch
          %134 = sbr.rel (%p132) target = $region16
        $region15: #{tpu_custom_call.1} parent=11 // pred_region
          _
        $region16: #{tpu_custom_call.1} parent=11 // pred_fallthru
          _
      $region12: #{tpu_custom_call.1} parent=5 // pred_fallthru
        _
      %p135 = scmp.lt.s32.totalorder %s15, 8
      // Predicated region
      $region17: #{tpu_custom_call.1} parent=5 // pred_check
        %p136 = pneg %p135
      $region18: #{tpu_custom_call.1} parent=5 // pred_check_branch
        %138 = sbr.rel (%p136) target = $region20
      $region19: #{tpu_custom_call.1} parent=5 // pred_region
        // Predicated region
        $region21: #{tpu_custom_call.1} parent=19 // pred_check
          %p139 = pneg %p81
        $region22: #{tpu_custom_call.1} parent=19 // pred_check_branch
          %141 = sbr.rel (%p139) target = $region24
        $region23: #{tpu_custom_call.1} parent=19 // pred_region
          %s142 = sand.u32 %s71, 1
          %s143 = scalar_lea.sflag [#allocation7], %s142
          %s144 = sand.u32 %s71, 1
          %s145 = smul.addr %s144, 4
          %s146 = scalar_lea.vmem [#allocation6], %s145
          %s147 = ssub.s32 1, %s23
          %s148 = smul.u32 %s24, %s147
          %s150 = ssub.s32 64, 64
          %151 = vsyncadd %s143, %s150
          %s152 = smul.addr %s22, 2
          %s153 = sadd.s32 %s148, %s152
          %s154 = smul.addr %s153, 64
          %s155 = scalar_lea.hbm %s1, %s154
          %s157 = sshll.u32 %s146, 4
          %s158 = int_to_ptr.vmem [resolvable:$true] %s157
          %160 = dma.hbm_to_vmem [thread:$0]  %s155, 64, %s158, %s143
        $region24: #{tpu_custom_call.1} parent=19 // pred_fallthru
          _
      $region20: #{tpu_custom_call.1} parent=5 // pred_fallthru
        _
      %p161 = scmp.le.s32.totalorder 1, %s15
      %p162 = scmp.lt.s32.totalorder %s15, 9
      %p163 = pnand %p161, %p162
      %p164 = pneg %p163
      // Predicated region
      $region25: #{tpu_custom_call.1} parent=5 // pred_check
        _
      $region26: #{tpu_custom_call.1} parent=5 // pred_check_branch
        %166 = sbr.rel (%p163) target = $region28
      $region27: #{tpu_custom_call.1} parent=5 // pred_region
        %s167 = ssub.s32 %s15, 1
        %s168 = sand.u32 %s74, 1
        %s169 = scalar_lea.sflag [#allocation7], %s168
        %s170 = sand.u32 %s74, 1
        %s171 = smul.addr %s170, 4
        %s172 = scalar_lea.vmem [#allocation6], %s171
        // Predicated region
        $region29: #{tpu_custom_call.1} parent=27 // pred_check
          %p173 = pneg %p87
        $region30: #{tpu_custom_call.1} parent=27 // pred_check_branch
          %175 = sbr.rel (%p173) target = $region32
        $region31: #{tpu_custom_call.1} parent=27 // pred_region
          %176 = dma.done %s169, 64
        $region32: #{tpu_custom_call.1} parent=27 // pred_fallthru
          _
        %p177 = pneg %p55
        %p178 = pneg %p52
        %s179 = sand.u32 %s74, 1
        %s180 = scalar_lea.sflag [#allocation7], %s179
        %s181 = sand.u32 %s74, 1
        %s182 = smul.addr %s181, 4
        %s183 = scalar_lea.vmem [#allocation6], %s182
        %p184 = pneg %p87
        %p185 = pneg %p84
        %p186 = pneg %p117
        %p187 = pneg %p114
        %s188 = sand.u32 %s104, 1
        %s189 = scalar_lea.sflag [#allocation8], %s188
        %s190 = sand.u32 %s104, 1
        %s191 = smul.addr %s190, 4
        %s192 = scalar_lea.vmem [#allocation9], %s191
        %s193 = ssub.s32 1, %s26
        %s194 = smul.u32 %s27, %s193
        %s195 = smul.u32 %s27, %s26
        %p196 = scmp.eq.s32.totalorder %s26, 0
        // Predicated region
        $region33: #{tpu_custom_call.1} parent=27 // pred_check
          %p197 = pneg %p196
        $region34: #{tpu_custom_call.1} parent=27 // pred_check_branch
          %199 = sbr.rel (%p197) target = $region36
        $region35: #{tpu_custom_call.1} parent=27 // pred_region
          %v200 = vld [vmem:[%s172] sm:$0xf]
          %s201 = smul.u32 %s27, 4
          %s202 = scalar_lea.vmem [#allocation4], %s201
          %203 = vst [vmem:[%s202] sm:$0xf] %v200
          %204 = vmatprep.subr.mxu0 0.0
          %205 = vmatpush1.xpose.msra.mxu0 %v200
          %206 = vmatprep.subr.mxu0 0.0
          %207 = vmatpush1.xpose.msra.mxu0 0.0
          %208 = vmatprep.subr.mxu0 0.0
          %209 = vmatpush1.xpose.msra.mxu0 0.0
          %210 = vmatprep.subr.mxu0 0.0
          %211 = vmatpush1.xpose.msra.mxu0 0.0
          %212 = vmatprep.subr.mxu0 0.0
          %213 = vmatpush1.xpose.msra.mxu0 0.0
          %214 = vmatprep.subr.mxu0 0.0
          %215 = vmatpush1.xpose.msra.mxu0 0.0
          %216 = vmatprep.subr.mxu0 0.0
          %217 = vmatpush1.xpose.msra.mxu0 0.0
          %218 = vmatprep.subr.mxu0 0.0
          %219 = vmatpush1.xpose.msra.mxu0 0.0
          %220 = vmatprep.subr.mxu0 0.0
          %221 = vmatpush1.xpose.msra.mxu0 0.0
          %222 = vmatprep.subr.mxu0 0.0
          %223 = vmatpush1.xpose.msra.mxu0 0.0
          %224 = vmatprep.subr.mxu0 0.0
          %225 = vmatpush1.xpose.msra.mxu0 0.0
          %226 = vmatprep.subr.mxu0 0.0
          %227 = vmatpush1.xpose.msra.mxu0 0.0
          %228 = vmatprep.subr.mxu0 0.0
          %229 = vmatpush1.xpose.msra.mxu0 0.0
          %230 = vmatprep.subr.mxu0 0.0
          %231 = vmatpush1.xpose.msra.mxu0 0.0
          %232 = vmatprep.subr.mxu0 0.0
          %233 = vmatpush1.xpose.msra.mxu0 0.0
          %234 = vmatprep.subr.mxu0 0.0
          %235 = vmatpush1.xpose.msra.mxu0 0.0
          %236 = vmatprep.subr.mxu0 0.0
          %237 = vmatpush1.xpose.msra.mxu0 0.0
          %238 = vmatprep.subr.mxu0 0.0
          %239 = vmatpush1.xpose.msra.mxu0 0.0
          %240 = vmatprep.subr.mxu0 0.0
          %241 = vmatpush1.xpose.msra.mxu0 0.0
          %242 = vmatprep.subr.mxu0 0.0
          %243 = vmatpush1.xpose.msra.mxu0 0.0
          %244 = vmatprep.subr.mxu0 0.0
          %245 = vmatpush1.xpose.msra.mxu0 0.0
          %246 = vmatprep.subr.mxu0 0.0
          %247 = vmatpush1.xpose.msra.mxu0 0.0
          %248 = vmatprep.subr.mxu0 0.0
          %249 = vmatpush1.xpose.msra.mxu0 0.0
          %250 = vmatprep.subr.mxu0 0.0
          %251 = vmatpush1.xpose.msra.mxu0 0.0
          %252 = vmatprep.subr.mxu0 0.0
          %253 = vmatpush1.xpose.msra.mxu0 0.0
          %254 = vmatprep.subr.mxu0 0.0
          %255 = vmatpush1.xpose.msra.mxu0 0.0
          %256 = vmatprep.subr.mxu0 0.0
          %257 = vmatpush1.xpose.msra.mxu0 0.0
          %258 = vmatprep.subr.mxu0 0.0
          %259 = vmatpush1.xpose.msra.mxu0 0.0
          %260 = vmatprep.subr.mxu0 0.0
          %261 = vmatpush1.xpose.msra.mxu0 0.0
          %262 = vmatprep.subr.mxu0 0.0
          %263 = vmatpush1.xpose.msra.mxu0 0.0
          %264 = vmatprep.subr.mxu0 0.0
          %265 = vmatpush1.xpose.msra.mxu0 0.0
          %266 = vmatprep.subr.mxu0 0.0
          %267 = vmatpush1.xpose.msra.mxu0 0.0
          %268 = vmatprep.mubr.f32.mxu0 0.0
          %269 = vmatmul.mubr.f32.gmra.mrb[0].mxu0 %v200
          %v270 = vpop.f32.mrb[0].mxu0
          %v271 = vadd.f32 0.0, %v270
          %v272 = vpop.f32.mrb[0].mxu0
          %273 = vdwg.mxu0
          %p274 = scmp.eq.s32.totalorder %s27, 0
          // Predicated region
          $region37: #{tpu_custom_call.1} parent=35 // pred_check
            %p275 = pneg %p274
          $region38: #{tpu_custom_call.1} parent=35 // pred_check_branch
            %277 = sbr.rel (%p275) target = $region40
          $region39: #{tpu_custom_call.1} parent=35 // pred_region
            %vm278 = vcmask 27648
            %279 = vst.msk [vmem:[#allocation2] sm:$0xf] %vm278, %v271
          $region40: #{tpu_custom_call.1} parent=35 // pred_fallthru
            _
          %p280 = scmp.gt.s32.totalorder %s27, 0
          // Predicated region
          $region41: #{tpu_custom_call.1} parent=35 // pred_check
            %p281 = pneg %p280
          $region42: #{tpu_custom_call.1} parent=35 // pred_check_branch
            %283 = sbr.rel (%p281) target = $region44
          $region43: #{tpu_custom_call.1} parent=35 // pred_region
            %v284 = vld [vmem:[#allocation2] sm:$0xf]
            %v285 = vadd.f32 %v284, %v271
            %vm286 = vcmask 27648
            %287 = vst.msk [vmem:[#allocation2] sm:$0xf] %vm286, %v285
          $region44: #{tpu_custom_call.1} parent=35 // pred_fallthru
            _
          %p288 = scmp.eq.s32.totalorder %s27, 1
          // Predicated region
          $region45: #{tpu_custom_call.1} parent=35 // pred_check
            %p289 = pneg %p288
          $region46: #{tpu_custom_call.1} parent=35 // pred_check_branch
            %291 = sbr.rel (%p289) target = $region48
          $region47: #{tpu_custom_call.1} parent=35 // pred_region
            %v292 = vld [vmem:[#allocation2] sm:$0xf]
            %vm293 = vcmask 27648
            %v294 = vsel %vm293, %v292, inf
            %295 = vmin.xlane.f32.xlu0 %v294
            %v296 = vpop.xlane.xlu0 %295
            %v297 = vsub.f32 %v296, %v292
            %v298 = vmul.f32 %v297, 1.442695
            %v299 = vpow.pop %v298
            %v300 = vsel %vm293, %v299, 0.0
            %301 = vadd.xlane.f32.xlu0 %v300
            %v302 = vpop.xlane.xlu0 %301
            %v303 = vrcp.pop %v302
            %v304 = vmul.f32 %v299, %v303
            %s305 = sld [smem:[#allocation5]]
            %v306 = vstv %s305
            %v307 = vmul.f32 %v306, %v304
            %308 = vst.msk [vmem:[#allocation3] sm:$0xf] %vm293, %v307
          $region48: #{tpu_custom_call.1} parent=35 // pred_fallthru
            _
        $region36: #{tpu_custom_call.1} parent=27 // pred_fallthru
          _
        %p309 = scmp.eq.s32.totalorder %s26, 1
        // Predicated region
        $region49: #{tpu_custom_call.1} parent=27 // pred_check
          %p310 = pneg %p309
        $region50: #{tpu_custom_call.1} parent=27 // pred_check_branch
          %312 = sbr.rel (%p310) target = $region52
        $region51: #{tpu_custom_call.1} parent=27 // pred_region
          %s313 = smul.u32 %s27, 4
          %s314 = scalar_lea.vmem [#allocation4], %s313
          %v315 = vld [vmem:[%s314] sm:$0xf]
          %v316 = vld [vmem:[#allocation3] sm:$0xf]
          %vm317 = vcmask 31744
          %v319 = vsel %vm317, %v316, 0
          %vm321 = vcmask 1043456
          %v323 = vsel %vm321, %v315, 0
          %325 = vmatprep.subr.mxu0 0.0
          %326 = vmatpush1.msra.mxu0 %v323
          %327 = vmatprep.subr.mxu0 0.0
          %328 = vmatpush1.msra.mxu0 0.0
          %329 = vmatprep.subr.mxu0 0.0
          %330 = vmatpush1.msra.mxu0 0.0
          %331 = vmatprep.subr.mxu0 0.0
          %332 = vmatpush1.msra.mxu0 0.0
          %333 = vmatprep.subr.mxu0 0.0
          %334 = vmatpush1.msra.mxu0 0.0
          %335 = vmatprep.subr.mxu0 0.0
          %336 = vmatpush1.msra.mxu0 0.0
          %337 = vmatprep.subr.mxu0 0.0
          %338 = vmatpush1.msra.mxu0 0.0
          %339 = vmatprep.subr.mxu0 0.0
          %340 = vmatpush1.msra.mxu0 0.0
          %341 = vmatprep.subr.mxu0 0.0
          %342 = vmatpush1.msra.mxu0 0.0
          %343 = vmatprep.subr.mxu0 0.0
          %344 = vmatpush1.msra.mxu0 0.0
          %345 = vmatprep.subr.mxu0 0.0
          %346 = vmatpush1.msra.mxu0 0.0
          %347 = vmatprep.subr.mxu0 0.0
          %348 = vmatpush1.msra.mxu0 0.0
          %349 = vmatprep.subr.mxu0 0.0
          %350 = vmatpush1.msra.mxu0 0.0
          %351 = vmatprep.subr.mxu0 0.0
          %352 = vmatpush1.msra.mxu0 0.0
          %353 = vmatprep.subr.mxu0 0.0
          %354 = vmatpush1.msra.mxu0 0.0
          %355 = vmatprep.subr.mxu0 0.0
          %356 = vmatpush1.msra.mxu0 0.0
          %357 = vmatprep.subr.mxu0 0.0
          %358 = vmatpush1.msra.mxu0 0.0
          %359 = vmatprep.subr.mxu0 0.0
          %360 = vmatpush1.msra.mxu0 0.0
          %361 = vmatprep.subr.mxu0 0.0
          %362 = vmatpush1.msra.mxu0 0.0
          %363 = vmatprep.subr.mxu0 0.0
          %364 = vmatpush1.msra.mxu0 0.0
          %365 = vmatprep.subr.mxu0 0.0
          %366 = vmatpush1.msra.mxu0 0.0
          %367 = vmatprep.subr.mxu0 0.0
          %368 = vmatpush1.msra.mxu0 0.0
          %369 = vmatprep.subr.mxu0 0.0
          %370 = vmatpush1.msra.mxu0 0.0
          %371 = vmatprep.subr.mxu0 0.0
          %372 = vmatpush1.msra.mxu0 0.0
          %373 = vmatprep.subr.mxu0 0.0
          %374 = vmatpush1.msra.mxu0 0.0
          %375 = vmatprep.subr.mxu0 0.0
          %376 = vmatpush1.msra.mxu0 0.0
          %377 = vmatprep.subr.mxu0 0.0
          %378 = vmatpush1.msra.mxu0 0.0
          %379 = vmatprep.subr.mxu0 0.0
          %380 = vmatpush1.msra.mxu0 0.0
          %381 = vmatprep.subr.mxu0 0.0
          %382 = vmatpush1.msra.mxu0 0.0
          %383 = vmatprep.subr.mxu0 0.0
          %384 = vmatpush1.msra.mxu0 0.0
          %385 = vmatprep.subr.mxu0 0.0
          %386 = vmatpush1.msra.mxu0 0.0
          %387 = vmatprep.subr.mxu0 0.0
          %388 = vmatpush1.msra.mxu0 0.0
          %389 = vmatprep.mubr.f32.mxu0 0.0
          %390 = vmatmul.mubr.f32.gmra.mrb[0].mxu0 %v319
          %v391 = vpop.f32.mrb[0].mxu0
          %v392 = vadd.f32 %v315, %v391
          %v393 = vpop.f32.mrb[0].mxu0
          %394 = vdwg.mxu0
          %395 = vst [vmem:[%s192] sm:$0xf] %v392
        $region52: #{tpu_custom_call.1} parent=27 // pred_fallthru
          _
        %s396 = sand.u32 %s104, 1
        %s397 = scalar_lea.sflag [#allocation8], %s396
        %s398 = sand.u32 %s104, 1
        %s399 = smul.addr %s398, 4
        %s400 = scalar_lea.vmem [#allocation9], %s399
        // Predicated region
        $region53: #{tpu_custom_call.1} parent=27 // pred_check
          %p401 = pneg %p114
        $region54: #{tpu_custom_call.1} parent=27 // pred_check_branch
          %403 = sbr.rel (%p401) target = $region56
        $region55: #{tpu_custom_call.1} parent=27 // pred_region
          %s404 = smul.u32 %s27, %s26
          %s406 = ssub.s32 64, 64
          %407 = vsyncadd %s397, %s406
          %s408 = smul.addr %s25, 2
          %s409 = sadd.s32 %s404, %s408
          %s410 = smul.addr %s409, 64
          %s411 = scalar_lea.hbm %s2, %s410
          %s413 = sshll.u32 %s400, 4
          %s414 = int_to_ptr.vmem [resolvable:$true] %s413
          %416 = dma.vmem_to_hbm [thread:$0]  %s414, 64, %s411, %s397
        $region56: #{tpu_custom_call.1} parent=27 // pred_fallthru
          _
      $region28: #{tpu_custom_call.1} parent=5 // pred_fallthru
        _
      %p417 = scmp.le.s32.totalorder 2, %s15
      // Predicated region
      $region57: #{tpu_custom_call.1} parent=5 // pred_check
        %p418 = pneg %p417
      $region58: #{tpu_custom_call.1} parent=5 // pred_check_branch
        %420 = sbr.rel (%p418) target = $region60
      $region59: #{tpu_custom_call.1} parent=5 // pred_region
        %s421 = ssub.s32 %s15, 2
        // Predicated region
        $region61: #{tpu_custom_call.1} parent=59 // pred_check
          %p422 = pneg %p120
        $region62: #{tpu_custom_call.1} parent=59 // pred_check_branch
          %424 = sbr.rel (%p422) target = $region64
        $region63: #{tpu_custom_call.1} parent=59 // pred_region
          %s425 = sand.u32 %s105, 1
          %s426 = scalar_lea.sflag [#allocation8], %s425
          %s427 = sand.u32 %s105, 1
          %s428 = smul.addr %s427, 4
          %s429 = scalar_lea.vmem [#allocation9], %s428
          %430 = dma.done %s426, 64
        $region64: #{tpu_custom_call.1} parent=59 // pred_fallthru
          _
      $region60: #{tpu_custom_call.1} parent=5 // pred_fallthru
        _
    $region6: #{tpu_custom_call.1} parent=1 // loop_footer
      %s19 = sadd.s32 1, %s15
    $region7: #{tpu_custom_call.1} parent=1 // loop_footer_branch
      %14 = sbr.rel target = $region3
    $region8: #{tpu_custom_call.1} parent=1 // loop_exit
      _
    %431 = vsyncpa [#allocation7], 1
    %s432 = scalar_lea.sflag [#allocation7], 1
    %433 = vsyncpa %s432, 1
    %434 = vsyncpa [#allocation8], 1
    %s435 = scalar_lea.sflag [#allocation8], 1
    %436 = vsyncpa %s435, 1

</llo_original>
